<compile_context>
chip_gen: v5e
topology: v5e:2x2
jax: 0.10.0
libtpu: 0.0.40
codegen_flags: <defaults>
</compile_context>

<pallas_src>
import functools

import jax
import jax.numpy as jnp
import numpy as np
from jax import lax
from jax.experimental import pallas as pl
from jax.experimental.pallas import tpu as pltpu


def _round_up(x, m):
    return ((x + m - 1) // m) * m


def _orthogonal(key, shape, gain):
    """Deterministic orthogonal init (QR-based), matching nn.init.orthogonal_ semantics."""
    rows, cols = shape
    flat = jax.random.normal(key, (max(rows, cols), min(rows, cols)), dtype=jnp.float32)
    q, r = jnp.linalg.qr(flat)
    d = jnp.diag(r)
    q = q * jnp.where(d >= 0, 1.0, -1.0)  # sign fix; guards d == 0 (maps to +1)
    if rows < cols:
        q = q.T
    return gain * q[:rows, :cols]


def mlp_kernel(x_ref, w1_ref, b1_ref, w2_ref, b2_ref, w3r_ref, b3_ref, o_ref):
    # Layer 1: [bm, D_in] @ [D_in, Hp] + [1, Hp] -> ReLU
    h1 = jnp.dot(x_ref[...], w1_ref[...], preferred_element_type=jnp.float32) + b1_ref[...]
    h1 = jnp.maximum(h1, 0.0)
    # Layer 2: [bm, Hp] @ [Hp, Hp] + [1, Hp] -> ReLU
    h2 = jnp.dot(h1, w2_ref[...], preferred_element_type=jnp.float32) + b2_ref[...]
    h2 = jnp.maximum(h2, 0.0)
    # Value head, lane-dense: w3r is the (1, Hp) weight row replicated to (8, Hp).
    # Contract the hidden dim of both operands -> (8, bm) with the batch on lanes.
    v = lax.dot_general(w3r_ref[...], h2, (((1,), (1,)), ((), ())),
                        preferred_element_type=jnp.float32)
    o_ref[...] = v + b3_ref[0, 0]


@functools.partial(jax.jit, static_argnames=("bm",))
def mlp_base_forward(x, w1, b1, w2, b2, w3r, b3, *, bm=512):
    B, d_in = x.shape
    Hp = w1.shape[1]  # padded hidden size (multiple of 128)
    # Keep bm a multiple of 128 (lane width), clamp to the padded batch, pad ragged B.
    bm = min(bm, _round_up(B, 128))
    B_pad = _round_up(B, bm)
    if B_pad != B:
        x = jnp.pad(x, ((0, B_pad - B), (0, 0)))
    num_tiles = B_pad // bm

    rep = lambda i: (0, 0)  # weights/biases are VMEM-resident across all batch tiles

    out = pl.pallas_call(
        mlp_kernel,
        out_shape=jax.ShapeDtypeStruct((num_tiles * 8, bm), jnp.float32),
        grid_spec=pltpu.PrefetchScalarGridSpec(
            num_scalar_prefetch=0,
            grid=(num_tiles,),
            in_specs=[
                pl.BlockSpec((bm, d_in), lambda i: (i, 0)),          # x tile
                pl.BlockSpec((d_in, Hp), rep),                       # W1 (pre-transposed, H-padded)
                pl.BlockSpec((1, Hp), rep),                          # b1
                pl.BlockSpec((Hp, Hp), rep),                         # W2
                pl.BlockSpec((1, Hp), rep),                          # b2
                pl.BlockSpec((8, Hp), rep),                          # W3 row, replicated x8
                pl.BlockSpec(memory_space=pltpu.MemorySpace.SMEM),   # b3 scalar
            ],
            out_specs=pl.BlockSpec((8, bm), lambda i: (i, 0)),
        ),
        compiler_params=pltpu.CompilerParams(
            dimension_semantics=("parallel",),
        ),
    )(x, w1, b1, w2, b2, w3r, b3)

    # out is (num_tiles*8, bm): rows 8i..8i+7 all carry tile i's values, batch on lanes.
    vals = out[::8, :].reshape(B_pad, 1)
    return vals[:B]


def make_params(key, num_inputs, hidden_size=64):
    """Params matching MLPBase.__init__ (orthogonal gain=sqrt(2), bias 0), padded for TPU.

    Weights are stored pre-transposed ([in, out]); the hidden dim is zero-padded to a
    multiple of 128 (padding rows/cols are zero, so results are identical to the unpadded
    math).  W3 is kept in [out, in] layout and replicated to 8 rows so the kernel can emit
    a dense (8, bm) lane-major output block.
    """
    k1, k2, k3 = jax.random.split(key, 3)
    gain = float(np.sqrt(2.0))
    H = hidden_size
    Hp = _round_up(H, 128)
    w1 = _orthogonal(k1, (H, num_inputs), gain)  # torch layout [out, in]
    w2 = _orthogonal(k2, (H, H), gain)
    w3 = _orthogonal(k3, (1, H), gain)
    w1p = jnp.pad(w1.T, ((0, 0), (0, Hp - H)))                       # [in, Hp]
    w2p = jnp.pad(w2.T, ((0, Hp - H), (0, Hp - H)))                  # [Hp, Hp]
    w3r = jnp.tile(jnp.pad(w3, ((0, 0), (0, Hp - H))), (8, 1))       # [8, Hp]
    b1 = jnp.zeros((1, Hp), jnp.float32)
    b2 = jnp.zeros((1, Hp), jnp.float32)
    b3 = jnp.zeros((1, 1), jnp.float32)
    return w1p, b1, w2p, b2, w3r, b3


def reference_forward(x, w1, b1, w2, b2, w3r, b3):
    h1 = jnp.maximum(x @ w1 + b1, 0.0)
    h2 = jnp.maximum(h1 @ w2 + b2, 0.0)
    return h2 @ w3r[0:1, :].T + b3


if __name__ == "__main__":
    key = jax.random.PRNGKey(0)
    kx, kx2, kp = jax.random.split(key, 3)

    batch = 8
    num_inputs = 32
    hidden_size = 64

    params = make_params(kp, num_inputs, hidden_size)

    # Small demo batch (padded up to a single 128-row tile).
    x = jax.random.normal(kx, (batch, num_inputs), dtype=jnp.float32)
    out = jax.block_until_ready(mlp_base_forward(x, *params))
    ref = reference_forward(x, *params)
    assert out.shape == (batch, 1), out.shape
    np.testing.assert_allclose(np.asarray(out), np.asarray(ref), rtol=1e-4, atol=1e-5)

    # Ragged, multi-tile batch exercises zero-padding and the parallel grid axis.
    x2 = jax.random.normal(kx2, (300, num_inputs), dtype=jnp.float32)
    out2 = jax.block_until_ready(mlp_base_forward(x2, *params, bm=128))
    ref2 = reference_forward(x2, *params)
    assert out2.shape == (300, 1), out2.shape
    np.testing.assert_allclose(np.asarray(out2), np.asarray(ref2), rtol=1e-4, atol=1e-5)

    print("KERNEL_OK")
</pallas_src>

<mosaic_0001>
module attributes {stable_mosaic.version = 11 : i64} {
  func.func @mlp_kernel(%arg0: i32, %arg1: memref<128x32xf32, #tpu.memory_space<vmem>>, %arg2: memref<32x128xf32, #tpu.memory_space<vmem>>, %arg3: memref<1x128xf32, #tpu.memory_space<vmem>>, %arg4: memref<128x128xf32, #tpu.memory_space<vmem>>, %arg5: memref<1x128xf32, #tpu.memory_space<vmem>>, %arg6: memref<8x128xf32, #tpu.memory_space<vmem>>, %arg7: memref<1x1xf32, #tpu.memory_space<smem>>, %arg8: memref<8x128xf32, #tpu.memory_space<vmem>>) attributes {dimension_semantics = [#tpu.dimension_semantics<parallel>], iteration_bounds = array<i64: 1>, scalar_prefetch = 0 : i64, scratch_operands = 0 : i64, tpu.core_type = #tpu.core_type<tc>, window_params = [{transform_indices = @transform_0, window_bounds = array<i64: 128, 32>}, {pipeline_mode = #tpu.pipeline_mode<synchronous>, transform_indices = @transform_1, window_bounds = array<i64: 32, 128>}, {pipeline_mode = #tpu.pipeline_mode<synchronous>, transform_indices = @transform_2, window_bounds = array<i64: 1, 128>}, {pipeline_mode = #tpu.pipeline_mode<synchronous>, transform_indices = @transform_3, window_bounds = array<i64: 128, 128>}, {pipeline_mode = #tpu.pipeline_mode<synchronous>, transform_indices = @transform_4, window_bounds = array<i64: 1, 128>}, {pipeline_mode = #tpu.pipeline_mode<synchronous>, transform_indices = @transform_5, window_bounds = array<i64: 8, 128>}, {transform_indices = @transform_6, window_bounds = array<i64: 1, 1>}, {transform_indices = @transform_7, window_bounds = array<i64: 8, 128>}]} {
    %c0 = arith.constant 0 : index
    %c0_0 = arith.constant 0 : index
    %0 = vector.load %arg1[%c0, %c0_0] : memref<128x32xf32, #tpu.memory_space<vmem>>, vector<128x32xf32>
    %c0_1 = arith.constant 0 : index
    %c0_2 = arith.constant 0 : index
    %1 = vector.load %arg2[%c0_1, %c0_2] : memref<32x128xf32, #tpu.memory_space<vmem>>, vector<32x128xf32>
    %cst = arith.constant dense<0.000000e+00> : vector<128x128xf32>
    %2 = tpu.matmul %0, %1, %cst {dimension_numbers = #tpu.dot_dimension_numbers<[1], [0], [0], [1], [0, 0, 1, 1], [], []>} : vector<128x32xf32>, vector<32x128xf32>, vector<128x128xf32> -> vector<128x128xf32>
    %c0_3 = arith.constant 0 : index
    %c0_4 = arith.constant 0 : index
    %3 = vector.load %arg3[%c0_3, %c0_4] : memref<1x128xf32, #tpu.memory_space<vmem>>, vector<1x128xf32>
    %4 = vector.broadcast %3 : vector<1x128xf32> to vector<128x128xf32>
    %5 = arith.addf %2, %4 : vector<128x128xf32>
    %cst_5 = arith.constant 0.000000e+00 : f32
    %6 = vector.broadcast %cst_5 : f32 to vector<128x128xf32>
    %7 = arith.maximumf %5, %6 : vector<128x128xf32>
    %c0_6 = arith.constant 0 : index
    %c0_7 = arith.constant 0 : index
    %8 = vector.load %arg4[%c0_6, %c0_7] : memref<128x128xf32, #tpu.memory_space<vmem>>, vector<128x128xf32>
    %cst_8 = arith.constant dense<0.000000e+00> : vector<128x128xf32>
    %9 = tpu.matmul %7, %8, %cst_8 {dimension_numbers = #tpu.dot_dimension_numbers<[1], [0], [0], [1], [0, 0, 1, 1], [], []>} : vector<128x128xf32>, vector<128x128xf32>, vector<128x128xf32> -> vector<128x128xf32>
    %c0_9 = arith.constant 0 : index
    %c0_10 = arith.constant 0 : index
    %10 = vector.load %arg5[%c0_9, %c0_10] : memref<1x128xf32, #tpu.memory_space<vmem>>, vector<1x128xf32>
    %11 = vector.broadcast %10 : vector<1x128xf32> to vector<128x128xf32>
    %12 = arith.addf %9, %11 : vector<128x128xf32>
    %cst_11 = arith.constant 0.000000e+00 : f32
    %13 = vector.broadcast %cst_11 : f32 to vector<128x128xf32>
    %14 = arith.maximumf %12, %13 : vector<128x128xf32>
    %c0_12 = arith.constant 0 : index
    %c0_13 = arith.constant 0 : index
    %15 = vector.load %arg6[%c0_12, %c0_13] : memref<8x128xf32, #tpu.memory_space<vmem>>, vector<8x128xf32>
    %cst_14 = arith.constant dense<0.000000e+00> : vector<8x128xf32>
    %16 = tpu.matmul %15, %14, %cst_14 {dimension_numbers = #tpu.dot_dimension_numbers<[1], [1], [0], [0], [0, 0, 1, 0], [], []>} : vector<8x128xf32>, vector<128x128xf32>, vector<8x128xf32> -> vector<8x128xf32>
    %c0_15 = arith.constant 0 : index
    %c0_16 = arith.constant 0 : index
    %17 = memref.load %arg7[%c0_15, %c0_16] : memref<1x1xf32, #tpu.memory_space<smem>>
    %18 = vector.broadcast %17 : f32 to vector<8x128xf32>
    %19 = arith.addf %16, %18 : vector<8x128xf32>
    %c0_17 = arith.constant 0 : index
    %c0_18 = arith.constant 0 : index
    %20 = vector.load %arg8[%c0_17, %c0_18] : memref<8x128xf32, #tpu.memory_space<vmem>>, vector<8x128xf32>
    tpu.vector_store %arg8[%c0_17, %c0_18], %19 {strides = array<i32>} : memref<8x128xf32, #tpu.memory_space<vmem>>, vector<8x128xf32>,
    return
  }
  func.func @transform_0(%arg0: i32) -> (i32, i32) {
    %c0_i32 = arith.constant 0 : i32
    %c0_i32_0 = arith.constant 0 : i32
    return %arg0, %c0_i32 : i32, i32
  }
  func.func @transform_1(%arg0: i32) -> (i32, i32) {
    %c0_i32 = arith.constant 0 : i32
    %c0_i32_0 = arith.constant 0 : i32
    %c0_i32_1 = arith.constant 0 : i32
    return %c0_i32, %c0_i32_0 : i32, i32
  }
  func.func @transform_2(%arg0: i32) -> (i32, i32) {
    %c0_i32 = arith.constant 0 : i32
    %c0_i32_0 = arith.constant 0 : i32
    %c0_i32_1 = arith.constant 0 : i32
    return %c0_i32, %c0_i32_0 : i32, i32
  }
  func.func @transform_3(%arg0: i32) -> (i32, i32) {
    %c0_i32 = arith.constant 0 : i32
    %c0_i32_0 = arith.constant 0 : i32
    %c0_i32_1 = arith.constant 0 : i32
    return %c0_i32, %c0_i32_0 : i32, i32
  }
  func.func @transform_4(%arg0: i32) -> (i32, i32) {
    %c0_i32 = arith.constant 0 : i32
    %c0_i32_0 = arith.constant 0 : i32
    %c0_i32_1 = arith.constant 0 : i32
    return %c0_i32, %c0_i32_0 : i32, i32
  }
  func.func @transform_5(%arg0: i32) -> (i32, i32) {
    %c0_i32 = arith.constant 0 : i32
    %c0_i32_0 = arith.constant 0 : i32
    %c0_i32_1 = arith.constant 0 : i32
    return %c0_i32, %c0_i32_0 : i32, i32
  }
  func.func @transform_6(%arg0: i32) -> (i32, i32) {
    %c0_i32 = arith.constant 0 : i32
    %c0_i32_0 = arith.constant 0 : i32
    %c0_i32_1 = arith.constant 0 : i32
    return %c0_i32, %c0_i32_0 : i32, i32
  }
  func.func @transform_7(%arg0: i32) -> (i32, i32) {
    %c0_i32 = arith.constant 0 : i32
    %c0_i32_0 = arith.constant 0 : i32
    return %arg0, %c0_i32 : i32, i32
  }
}

</mosaic_0001>

<llo_original>
// kernel: mlp_base_forward.1
$region0: #{mlp_base_forward.1}
  #allocation0 [shape = 'u32[]', space=smem, size = 0x4, offset = 0x4, fixed_abs, tag = 'smem constant byte address 0x4 - core index']
  #allocation1 [shape = 'u32[72,128]{1,0:T(1,128)}', space=vmem, size = 0x9000, scoped, tag = 'internal scratch']
  #allocation2 [shape = 'f32[1,1]{1,0:T(1,128)S(6)}', space=smem, size = 0x200, scoped, tag = 'scoped memory for mlp_base_forward.1']
  %s0 = inlined_call_operand.vmem [shape: f32[128,32], index: 0, kind: input, shape index: {}]
  %s1 = inlined_call_operand.hbm [shape: f32[32,128], index: 1, kind: input, shape index: {}]
  %s2 = inlined_call_operand.vmem [shape: f32[1,128], index: 2, kind: input, shape index: {}]
  %s3 = inlined_call_operand.vmem [shape: f32[128,128], index: 3, kind: input, shape index: {}]
  %s4 = inlined_call_operand.vmem [shape: f32[1,128], index: 4, kind: input, shape index: {}]
  %s5 = inlined_call_operand.vmem [shape: f32[8,128], index: 5, kind: input, shape index: {}]
  %s6 = inlined_call_operand.<no memory space> [shape: f32[1,1], index: 6, kind: input, shape index: {}]
  %s7 = inlined_call_operand.vmem [shape: f32[8,128], index: 7, kind: output, shape index: {}]
  %s8 = sld [smem:[#allocation0]]
  $region42: #{mlp_base_forward.1} parent=0
    _
  %s10 = ssub.s32 1, %s8
  %s11 = scalar_select 0, %s10, %s8
  %12 = sst [smem:[#allocation2]] %s6
  $region1: #{mlp_base_forward.1} parent=0
    #allocation3 [shape = 'u8[16384]{0}', space=vmem, size = 0x4000, scoped, tag = 'input window, operand 1, single buffered']
    #allocation4 [shape = 's32[1]{0}', space=sflag, size = 0x4, scoped, tag = 'scoped memory for mlp_base_forward.1']
    %13 = vsyncpa [#allocation4], 0
    // Predicated region
    $region2: #{mlp_base_forward.1} parent=1 // pred_check
      _
    $region3: #{mlp_base_forward.1} parent=1 // pred_check_branch
      %15 = sbr.rel (0) target = $region5
    $region4: #{mlp_base_forward.1} parent=1 // pred_region
      _
    $region5: #{mlp_base_forward.1} parent=1 // pred_fallthru
      _
    // Predicated region
    $region6: #{mlp_base_forward.1} parent=1 // pred_check
      _
    $region7: #{mlp_base_forward.1} parent=1 // pred_check_branch
      %17 = sbr.rel (0) target = $region9
    $region8: #{mlp_base_forward.1} parent=1 // pred_region
      %19 = vsyncadd [#allocation4], 0
      %s20 = sshll.u32 %s1, 4
      %s21 = int_to_ptr.hbm [resolvable:$true] %s20
      %s22 = sshll.u32 [#allocation3], 4
      %s23 = int_to_ptr.vmem [resolvable:$true] %s22
      %28 = dma.hbm_to_vmem [thread:$0]  %s21, 512, %s23, [#allocation4], 128, 128, 8
    $region9: #{mlp_base_forward.1} parent=1 // pred_fallthru
      _
    // Predicated region
    $region10: #{mlp_base_forward.1} parent=1 // pred_check
      _
    $region11: #{mlp_base_forward.1} parent=1 // pred_check_branch
      %30 = sbr.rel (0) target = $region13
    $region12: #{mlp_base_forward.1} parent=1 // pred_region
      _
    $region13: #{mlp_base_forward.1} parent=1 // pred_fallthru
      _
    // Predicated region
    $region14: #{mlp_base_forward.1} parent=1 // pred_check
      _
    $region15: #{mlp_base_forward.1} parent=1 // pred_check_branch
      %32 = sbr.rel (0) target = $region17
    $region16: #{mlp_base_forward.1} parent=1 // pred_region
      _
    $region17: #{mlp_base_forward.1} parent=1 // pred_fallthru
      _
    // Predicated region
    $region18: #{mlp_base_forward.1} parent=1 // pred_check
      _
    $region19: #{mlp_base_forward.1} parent=1 // pred_check_branch
      %34 = sbr.rel (0) target = $region21
    $region20: #{mlp_base_forward.1} parent=1 // pred_region
      _
    $region21: #{mlp_base_forward.1} parent=1 // pred_fallthru
      _
    // Predicated region
    $region22: #{mlp_base_forward.1} parent=1 // pred_check
      _
    $region23: #{mlp_base_forward.1} parent=1 // pred_check_branch
      %36 = sbr.rel (0) target = $region25
    $region24: #{mlp_base_forward.1} parent=1 // pred_region
      _
    $region25: #{mlp_base_forward.1} parent=1 // pred_fallthru
      _
    // Predicated region
    $region26: #{mlp_base_forward.1} parent=1 // pred_check
      _
    $region27: #{mlp_base_forward.1} parent=1 // pred_check_branch
      %38 = sbr.rel (0) target = $region29
    $region28: #{mlp_base_forward.1} parent=1 // pred_region
      _
    $region29: #{mlp_base_forward.1} parent=1 // pred_fallthru
      _
    // Predicated region
    $region30: #{mlp_base_forward.1} parent=1 // pred_check
      _
    $region31: #{mlp_base_forward.1} parent=1 // pred_check_branch
      %40 = sbr.rel (0) target = $region33
    $region32: #{mlp_base_forward.1} parent=1 // pred_region
      %42 = dma.done [#allocation4], 512
    $region33: #{mlp_base_forward.1} parent=1 // pred_fallthru
      _
    %v43 = vld [vmem:[%s0] sm:$0xff]
    %v44 = vld [vmem:[%s0 + $0x8] sm:$0xff]
    %v45 = vld [vmem:[%s0 + $0x10] sm:$0xff]
    %v46 = vld [vmem:[%s0 + $0x18] sm:$0xff]
    %v47 = vld [vmem:[%s0 + $0x20] sm:$0xff]
    %v48 = vld [vmem:[%s0 + $0x28] sm:$0xff]
    %v49 = vld [vmem:[%s0 + $0x30] sm:$0xff]
    %v50 = vld [vmem:[%s0 + $0x38] sm:$0xff]
    %v51 = vld [vmem:[%s0 + $0x40] sm:$0xff]
    %v52 = vld [vmem:[%s0 + $0x48] sm:$0xff]
    %v53 = vld [vmem:[%s0 + $0x50] sm:$0xff]
    %v54 = vld [vmem:[%s0 + $0x58] sm:$0xff]
    %v55 = vld [vmem:[%s0 + $0x60] sm:$0xff]
    %v56 = vld [vmem:[%s0 + $0x68] sm:$0xff]
    %v57 = vld [vmem:[%s0 + $0x70] sm:$0xff]
    %v58 = vld [vmem:[%s0 + $0x78] sm:$0xff]
    %v59 = vld [vmem:[#allocation3] sm:$0xff]
    %v60 = vld [vmem:[#allocation3 + $0x8] sm:$0xff]
    %v61 = vld [vmem:[#allocation3 + $0x10] sm:$0xff]
    %v62 = vld [vmem:[#allocation3 + $0x18] sm:$0xff]
    %v63 = vld [vmem:[%s2] sm:$0x1]
    %v65 = vperm.slane %v63, 0
    %vm67 = vcmask 261120
    %v69 = vsel %vm67, %v43, 0
    %v72 = vsel %vm67, %v44, 0
    %v75 = vsel %vm67, %v45, 0
    %v78 = vsel %vm67, %v46, 0
    %v81 = vsel %vm67, %v47, 0
    %v84 = vsel %vm67, %v48, 0
    %v87 = vsel %vm67, %v49, 0
    %v90 = vsel %vm67, %v50, 0
    %v93 = vsel %vm67, %v51, 0
    %v96 = vsel %vm67, %v52, 0
    %v99 = vsel %vm67, %v53, 0
    %v102 = vsel %vm67, %v54, 0
    %v105 = vsel %vm67, %v55, 0
    %v108 = vsel %vm67, %v56, 0
    %v111 = vsel %vm67, %v57, 0
    %v114 = vsel %vm67, %v58, 0
    %116 = vmatpush.msra.mxu0 0.0
    %117 = vmatpush.msra.mxu0 0.0
    %118 = vmatpush.msra.mxu0 0.0
    %119 = vmatpush.msra.mxu0 0.0
    %120 = vmatpush.msra.mxu0 0.0
    %121 = vmatpush.msra.mxu0 0.0
    %122 = vmatpush.msra.mxu0 0.0
    %123 = vmatpush.msra.mxu0 0.0
    %124 = vmatpush.msra.mxu0 0.0
    %125 = vmatpush.msra.mxu0 0.0
    %126 = vmatpush.msra.mxu0 0.0
    %127 = vmatpush.msra.mxu0 0.0
    %128 = vmatpush.msra.mxu0 %v62
    %129 = vmatpush.msra.mxu0 %v61
    %130 = vmatpush.msra.mxu0 %v60
    %131 = vmatpush.msra.mxu0 %v59
    %132 = vmatmul.f32.gmra.mxu0 %v69
    %v133 = vpop.f32.mrf.mxu0
    %v134 = vadd.f32 %v65, %v133
    %135 = vmatmul.f32.gmra.mxu0 %v72
    %v136 = vpop.f32.mrf.mxu0
    %v137 = vadd.f32 %v65, %v136
    %138 = vmatmul.f32.gmra.mxu0 %v75
    %v139 = vpop.f32.mrf.mxu0
    %v140 = vadd.f32 %v65, %v139
    %141 = vmatmul.f32.gmra.mxu0 %v78
    %v142 = vpop.f32.mrf.mxu0
    %v143 = vadd.f32 %v65, %v142
    %144 = vmatmul.f32.gmra.mxu0 %v81
    %v145 = vpop.f32.mrf.mxu0
    %v146 = vadd.f32 %v65, %v145
    %147 = vmatmul.f32.gmra.mxu0 %v84
    %v148 = vpop.f32.mrf.mxu0
    %v149 = vadd.f32 %v65, %v148
    %150 = vmatmul.f32.gmra.mxu0 %v87
    %v151 = vpop.f32.mrf.mxu0
    %v152 = vadd.f32 %v65, %v151
    %153 = vmatmul.f32.gmra.mxu0 %v90
    %v154 = vpop.f32.mrf.mxu0
    %v155 = vadd.f32 %v65, %v154
    %156 = vmatmul.f32.gmra.mxu0 %v93
    %v157 = vpop.f32.mrf.mxu0
    %v158 = vadd.f32 %v65, %v157
    %159 = vmatmul.f32.gmra.mxu0 %v96
    %v160 = vpop.f32.mrf.mxu0
    %v161 = vadd.f32 %v65, %v160
    %162 = vmatmul.f32.gmra.mxu0 %v99
    %v163 = vpop.f32.mrf.mxu0
    %v164 = vadd.f32 %v65, %v163
    %165 = vmatmul.f32.gmra.mxu0 %v102
    %v166 = vpop.f32.mrf.mxu0
    %v167 = vadd.f32 %v65, %v166
    %168 = vmatmul.f32.gmra.mxu0 %v105
    %v169 = vpop.f32.mrf.mxu0
    %v170 = vadd.f32 %v65, %v169
    %171 = vmatmul.f32.gmra.mxu0 %v108
    %v172 = vpop.f32.mrf.mxu0
    %v173 = vadd.f32 %v65, %v172
    %174 = vmatmul.f32.gmra.mxu0 %v111
    %v175 = vpop.f32.mrf.mxu0
    %v176 = vadd.f32 %v65, %v175
    %177 = vmatmul.f32.gmra.mxu0 %v114
    %v178 = vpop.f32.mrf.mxu0
    %v179 = vadd.f32 %v65, %v178
    %180 = vdwg.mxu0
    %v181 = vmax.f32 %v134, 0.0
    %v182 = vmax.f32 %v137, 0.0
    %v183 = vmax.f32 %v140, 0.0
    %v184 = vmax.f32 %v143, 0.0
    %v185 = vmax.f32 %v146, 0.0
    %v186 = vmax.f32 %v149, 0.0
    %v187 = vmax.f32 %v152, 0.0
    %v188 = vmax.f32 %v155, 0.0
    %v189 = vmax.f32 %v158, 0.0
    %v190 = vmax.f32 %v161, 0.0
    %v191 = vmax.f32 %v164, 0.0
    %v192 = vmax.f32 %v167, 0.0
    %v193 = vmax.f32 %v170, 0.0
    %v194 = vmax.f32 %v173, 0.0
    %v195 = vmax.f32 %v176, 0.0
    %v196 = vmax.f32 %v179, 0.0
    %v197 = vld [vmem:[%s3] sm:$0xff]
    %v198 = vld [vmem:[%s3 + $0x8] sm:$0xff]
    %v199 = vld [vmem:[%s3 + $0x10] sm:$0xff]
    %v200 = vld [vmem:[%s3 + $0x18] sm:$0xff]
    %v201 = vld [vmem:[%s3 + $0x20] sm:$0xff]
    %v202 = vld [vmem:[%s3 + $0x28] sm:$0xff]
    %v203 = vld [vmem:[%s3 + $0x30] sm:$0xff]
    %v204 = vld [vmem:[%s3 + $0x38] sm:$0xff]
    %v205 = vld [vmem:[%s3 + $0x40] sm:$0xff]
    %v206 = vld [vmem:[%s3 + $0x48] sm:$0xff]
    %v207 = vld [vmem:[%s3 + $0x50] sm:$0xff]
    %v208 = vld [vmem:[%s3 + $0x58] sm:$0xff]
    %v209 = vld [vmem:[%s3 + $0x60] sm:$0xff]
    %v210 = vld [vmem:[%s3 + $0x68] sm:$0xff]
    %v211 = vld [vmem:[%s3 + $0x70] sm:$0xff]
    %v212 = vld [vmem:[%s3 + $0x78] sm:$0xff]
    %v213 = vld [vmem:[%s4] sm:$0x1]
    %v215 = vperm.slane %v213, 0
    %217 = vmatpush.msra.mxu0 %v212
    %218 = vmatpush.msra.mxu0 %v211
    %219 = vmatpush.msra.mxu0 %v210
    %220 = vmatpush.msra.mxu0 %v209
    %221 = vmatpush.msra.mxu0 %v208
    %222 = vmatpush.msra.mxu0 %v207
    %223 = vmatpush.msra.mxu0 %v206
    %224 = vmatpush.msra.mxu0 %v205
    %225 = vmatpush.msra.mxu0 %v204
    %226 = vmatpush.msra.mxu0 %v203
    %227 = vmatpush.msra.mxu0 %v202
    %228 = vmatpush.msra.mxu0 %v201
    %229 = vmatpush.msra.mxu0 %v200
    %230 = vmatpush.msra.mxu0 %v199
    %231 = vmatpush.msra.mxu0 %v198
    %232 = vmatpush.msra.mxu0 %v197
    %233 = vmatmul.f32.gmra.mxu0 %v181
    %v234 = vpop.f32.mrf.mxu0
    %v235 = vadd.f32 %v215, %v234
    %236 = vmatmul.f32.gmra.mxu0 %v182
    %v237 = vpop.f32.mrf.mxu0
    %v238 = vadd.f32 %v215, %v237
    %239 = vmatmul.f32.gmra.mxu0 %v183
    %v240 = vpop.f32.mrf.mxu0
    %v241 = vadd.f32 %v215, %v240
    %242 = vmatmul.f32.gmra.mxu0 %v184
    %v243 = vpop.f32.mrf.mxu0
    %v244 = vadd.f32 %v215, %v243
    %245 = vmatmul.f32.gmra.mxu0 %v185
    %v246 = vpop.f32.mrf.mxu0
    %v247 = vadd.f32 %v215, %v246
    %248 = vmatmul.f32.gmra.mxu0 %v186
    %v249 = vpop.f32.mrf.mxu0
    %v250 = vadd.f32 %v215, %v249
    %251 = vmatmul.f32.gmra.mxu0 %v187
    %v252 = vpop.f32.mrf.mxu0
    %v253 = vadd.f32 %v215, %v252
    %254 = vmatmul.f32.gmra.mxu0 %v188
    %v255 = vpop.f32.mrf.mxu0
    %v256 = vadd.f32 %v215, %v255
    %257 = vmatmul.f32.gmra.mxu0 %v189
    %v258 = vpop.f32.mrf.mxu0
    %v259 = vadd.f32 %v215, %v258
    %260 = vmatmul.f32.gmra.mxu0 %v190
    %v261 = vpop.f32.mrf.mxu0
    %v262 = vadd.f32 %v215, %v261
    %263 = vmatmul.f32.gmra.mxu0 %v191
    %v264 = vpop.f32.mrf.mxu0
    %v265 = vadd.f32 %v215, %v264
    %266 = vmatmul.f32.gmra.mxu0 %v192
    %v267 = vpop.f32.mrf.mxu0
    %v268 = vadd.f32 %v215, %v267
    %269 = vmatmul.f32.gmra.mxu0 %v193
    %v270 = vpop.f32.mrf.mxu0
    %v271 = vadd.f32 %v215, %v270
    %272 = vmatmul.f32.gmra.mxu0 %v194
    %v273 = vpop.f32.mrf.mxu0
    %v274 = vadd.f32 %v215, %v273
    %275 = vmatmul.f32.gmra.mxu0 %v195
    %v276 = vpop.f32.mrf.mxu0
    %v277 = vadd.f32 %v215, %v276
    %278 = vmatmul.f32.gmra.mxu0 %v196
    %v279 = vpop.f32.mrf.mxu0
    %v280 = vadd.f32 %v215, %v279
    %281 = vdwg.mxu0
    %v282 = vmax.f32 %v235, 0.0
    %v283 = vmax.f32 %v238, 0.0
    %v284 = vmax.f32 %v241, 0.0
    %v285 = vmax.f32 %v244, 0.0
    %v286 = vmax.f32 %v247, 0.0
    %v287 = vmax.f32 %v250, 0.0
    %v288 = vmax.f32 %v253, 0.0
    %v289 = vmax.f32 %v256, 0.0
    %v290 = vmax.f32 %v259, 0.0
    %v291 = vmax.f32 %v262, 0.0
    %v292 = vmax.f32 %v265, 0.0
    %v293 = vmax.f32 %v268, 0.0
    %v294 = vmax.f32 %v271, 0.0
    %v295 = vmax.f32 %v274, 0.0
    %v296 = vmax.f32 %v277, 0.0
    %v297 = vmax.f32 %v280, 0.0
    %v298 = vld [vmem:[%s5] sm:$0xff]
    %s299 = sld [smem:[#allocation2]]
    %v300 = vstv %s299
    %301 = vmatpush.xpose.msra.mxu0 %v297
    %302 = vmatpush.xpose.msra.mxu0 %v296
    %303 = vmatpush.xpose.msra.mxu0 %v295
    %304 = vmatpush.xpose.msra.mxu0 %v294
    %305 = vmatpush.xpose.msra.mxu0 %v293
    %306 = vmatpush.xpose.msra.mxu0 %v292
    %307 = vmatpush.xpose.msra.mxu0 %v291
    %308 = vmatpush.xpose.msra.mxu0 %v290
    %309 = vmatpush.xpose.msra.mxu0 %v289
    %310 = vmatpush.xpose.msra.mxu0 %v288
    %311 = vmatpush.xpose.msra.mxu0 %v287
    %312 = vmatpush.xpose.msra.mxu0 %v286
    %313 = vmatpush.xpose.msra.mxu0 %v285
    %314 = vmatpush.xpose.msra.mxu0 %v284
    %315 = vmatpush.xpose.msra.mxu0 %v283
    %316 = vmatpush.xpose.msra.mxu0 %v282
    %317 = vmatmul.f32.gmra.mxu0 %v298
    %v318 = vpop.f32.mrf.mxu0
    %v319 = vadd.f32 %v300, %v318
    %320 = vdwg.mxu0
    %321 = vst [vmem:[%s7] sm:$0xff] %v319
    // Predicated region
    $region34: #{mlp_base_forward.1} parent=1 // pred_check
      _
    $region35: #{mlp_base_forward.1} parent=1 // pred_check_branch
      %323 = sbr.rel (0) target = $region37
    $region36: #{mlp_base_forward.1} parent=1 // pred_region
      _
    $region37: #{mlp_base_forward.1} parent=1 // pred_fallthru
      _
    // Predicated region
    $region38: #{mlp_base_forward.1} parent=1 // pred_check
      _
    $region39: #{mlp_base_forward.1} parent=1 // pred_check_branch
      %325 = sbr.rel (0) target = $region41
    $region40: #{mlp_base_forward.1} parent=1 // pred_region
      _
    $region41: #{mlp_base_forward.1} parent=1 // pred_fallthru
      _
    %326 = vsyncpa [#allocation4], 1

</llo_original>
